<compile_context>
chip_gen: v5e
topology: v5e:2x2
jax: 0.10.0
libtpu: 0.0.40
codegen_flags: <defaults>
</compile_context>

<pallas_src>
import jax
import jax.numpy as jnp
from jax.experimental import pallas as pl
from jax.experimental.pallas import tpu as pltpu


def _round_up(x, m):
    return ((x + m - 1) // m) * m


def _conv_bn_relu_kernel(x_ref, w_ref, b_ref, o_ref):
    # x_ref: (Nb, Ci, T)   spatial tile, channels on sublanes / spatial on lanes.
    # w_ref: (Co, Ci)      conv weight with BN scale folded in (activation dtype).
    # b_ref: (Co, 1)       folded BN bias (f32).
    # o_ref: (Nb, Co, T)   lane-dense output tile.
    w = w_ref[...]
    b = b_ref[...]
    for n in range(x_ref.shape[0]):          # Nb is small and static
        acc = jnp.dot(w, x_ref[n], preferred_element_type=jnp.float32)
        o_ref[n] = jnp.maximum(acc + b, 0.0).astype(o_ref.dtype)


def _conv_bn_relu_acc_kernel(x_ref, w_ref, b_ref, o_ref, acc_ref):
    # Large-Ci path: grid axis 2 walks input-channel blocks; acc_ref is f32 VMEM scratch.
    k = pl.program_id(2)

    @pl.when(k == 0)
    def _():
        acc_ref[...] = jnp.zeros_like(acc_ref)

    w = w_ref[...]
    for n in range(x_ref.shape[0]):
        acc_ref[n] = acc_ref[n] + jnp.dot(w, x_ref[n],
                                          preferred_element_type=jnp.float32)

    @pl.when(k == pl.num_programs(2) - 1)
    def _():
        b = b_ref[...]
        for n in range(x_ref.shape[0]):
            o_ref[n] = jnp.maximum(acc_ref[n] + b, 0.0).astype(o_ref.dtype)


def conv_module_forward(x_nchw, w_conv, gamma, beta, running_mean, running_var,
                        eps=1e-5):
    """Equivalent of Conv(chi, cho).forward(x) with BatchNorm in inference mode.

    x_nchw:  (N, Ci, H, W)
    w_conv:  (Co, Ci, 1, 1)   -- nn.Conv2d(ci, co, 1, bias=False).weight
    gamma, beta, running_mean, running_var: (Co,)
    """
    N, Ci, H, W = x_nchw.shape
    Co = w_conv.shape[0]
    HW = H * W
    x_dtype = x_nchw.dtype
    db = jnp.dtype(x_dtype).itemsize

    # ---- fold BN (running stats) into the conv:  y = relu( (W*scale) @ x + bias ) ----
    scale = (gamma.astype(jnp.float32)
             / jnp.sqrt(running_var.astype(jnp.float32) + eps))               # (Co,)
    bias2d = (beta.astype(jnp.float32)
              - running_mean.astype(jnp.float32) * scale).reshape(Co, 1)      # (Co,1) f32
    w2d = (w_conv.reshape(Co, Ci).astype(jnp.float32)
           * scale.reshape(Co, 1)).astype(x_dtype)                            # (Co,Ci)

    # Free reshape: channels stay on the sublane axis, spatial becomes the lane axis.
    x3d = x_nchw.reshape(N, Ci, HW)

    # ---- generation-aware VMEM budget ----
    try:
        vmem_cap = int(getattr(pltpu.get_tpu_info(), "vmem_capacity_bytes", 64 << 20))
    except Exception:
        vmem_cap = 64 << 20  # conservative fallback (v7x-sized)
    if vmem_cap <= (64 << 20):          # v7x-class: 64 MiB per TensorCore
        vmem_budget, vmem_limit = 24 << 20, 48 << 20
    else:                               # v5e / v6e: 128 MiB
        vmem_budget, vmem_limit = 48 << 20, 80 << 20

    def _t_cap(kc_, nb_):
        # Spatial-tile cap (multiple of 128) from the VMEM budget:
        # double-buffered x + out tiles, f32 accumulator, resident weight+bias.
        per_lane = 2 * nb_ * (kc_ + Co) * db + 4 * nb_ * Co
        fixed = 2 * (Co * kc_ * db + Co * 4)
        avail = max(vmem_budget - fixed, per_lane * 128)
        return (avail // per_lane) // 128 * 128

    # ---- input-channel split (only for very large Ci; keeps spatial tiles lane-long) ----
    kc = Ci
    if _t_cap(Ci, 1) < 512:
        for cand in (1024, 512, 256, 128):
            if cand < Ci and Ci % cand == 0:
                kc = cand
                if _t_cap(cand, 1) >= 512:
                    break
    num_k = Ci // kc if Ci % kc == 0 else 1
    if Ci % kc != 0:                    # defensive; candidates always divide Ci
        kc, num_k = Ci, 1

    # ---- spatial tile (lane-dense, multiple of 128) ----
    t_full = _round_up(HW, 128)
    t_hw = min(t_full, _t_cap(kc, 1))

    # ---- batch block: amortize per-grid-step overhead (~2 MiB of HBM traffic / step) ----
    target_step_bytes = 2 << 20
    max_nb = 16
    Nb = 1
    while (Nb < min(N, max_nb)
           and Nb * (kc + Co) * t_hw * db < target_step_bytes
           and _t_cap(kc, Nb + 1) >= t_hw):
        Nb += 1

    # ---- guarantee >= 2 parallel grid steps (v7x has 2 TensorCores) ----
    par_steps = pl.cdiv(N, Nb) * pl.cdiv(HW, t_hw)
    if par_steps < 2:
        if N >= 2:
            Nb = (N + 1) // 2
        elif HW > 128:
            t_hw = _round_up(pl.cdiv(HW, 2), 128)

    out_shape = jax.ShapeDtypeStruct((N, Co, HW), x_dtype)
    cparams = pltpu.CompilerParams(
        dimension_semantics=("parallel", "parallel") + (("arbitrary",) if num_k > 1 else ()),
        vmem_limit_bytes=vmem_limit,
    )

    if num_k == 1:
        grid = (pl.cdiv(N, Nb), pl.cdiv(HW, t_hw))
        out3d = pl.pallas_call(
            _conv_bn_relu_kernel,
            out_shape=out_shape,
            grid_spec=pltpu.PrefetchScalarGridSpec(
                num_scalar_prefetch=0,
                grid=grid,
                in_specs=[
                    pl.BlockSpec((Nb, Ci, t_hw), lambda n, s: (n, 0, s)),   # x tile
                    pl.BlockSpec((Co, Ci), lambda n, s: (0, 0)),            # folded weight
                    pl.BlockSpec((Co, 1), lambda n, s: (0, 0)),             # folded bias
                ],
                out_specs=pl.BlockSpec((Nb, Co, t_hw), lambda n, s: (n, 0, s)),
            ),
            compiler_params=cparams,
        )(x3d, w2d, bias2d)
    else:
        grid = (pl.cdiv(N, Nb), pl.cdiv(HW, t_hw), num_k)
        out3d = pl.pallas_call(
            _conv_bn_relu_acc_kernel,
            out_shape=out_shape,
            grid_spec=pltpu.PrefetchScalarGridSpec(
                num_scalar_prefetch=0,
                grid=grid,
                in_specs=[
                    pl.BlockSpec((Nb, kc, t_hw), lambda n, s, k: (n, k, s)),
                    pl.BlockSpec((Co, kc), lambda n, s, k: (0, k)),
                    pl.BlockSpec((Co, 1), lambda n, s, k: (0, 0)),
                ],
                out_specs=pl.BlockSpec((Nb, Co, t_hw), lambda n, s, k: (n, 0, s)),
                scratch_shapes=[pltpu.VMEM((Nb, Co, t_hw), jnp.float32)],
            ),
            compiler_params=cparams,
        )(x3d, w2d, bias2d)

    return out3d.reshape(N, Co, H, W)    # free reshape back to NCHW


if __name__ == "__main__":
    # Shapes consistent with Conv(chi=4, cho=8) on a (2, 4, 16, 16) input.
    N, Ci, H, W, Co = 2, 4, 16, 16, 8
    key = jax.random.PRNGKey(0)
    kx, kw, kg, kb, km, kv = jax.random.split(key, 6)

    x = jax.random.normal(kx, (N, Ci, H, W), dtype=jnp.float32)

    # Deterministic synthetic parameters (shapes match the PyTorch module).
    w_conv = jax.random.normal(kw, (Co, Ci, 1, 1), dtype=jnp.float32) * 0.1
    gamma = jax.random.uniform(kg, (Co,), minval=0.5, maxval=1.5, dtype=jnp.float32)
    beta = jax.random.normal(kb, (Co,), dtype=jnp.float32) * 0.1
    running_mean = jax.random.normal(km, (Co,), dtype=jnp.float32) * 0.1
    running_var = jax.random.uniform(kv, (Co,), minval=0.5, maxval=1.5, dtype=jnp.float32)

    out = conv_module_forward(x, w_conv, gamma, beta, running_mean, running_var)
    jax.block_until_ready(out)

    # Plain-JAX reference of the same math, in the same NCHW orientation.
    scale = gamma / jnp.sqrt(running_var + 1e-5)
    bias = beta - running_mean * scale
    conv = jnp.einsum('oc,ncs->nos', w_conv.reshape(Co, Ci), x.reshape(N, Ci, H * W))
    ref = jnp.maximum(conv * scale[None, :, None] + bias[None, :, None], 0.0)
    ref = ref.reshape(N, Co, H, W)
    assert jnp.allclose(out, ref, atol=1e-5, rtol=1e-5), "mismatch vs reference"

    print("KERNEL_OK")
</pallas_src>

<mosaic_0001>
module attributes {stable_mosaic.version = 11 : i64} {
  func.func @_conv_bn_relu_kernel(%arg0: i32, %arg1: i32, %arg2: memref<1x4x256xf32, #tpu.memory_space<vmem>>, %arg3: memref<8x4xf32, #tpu.memory_space<vmem>>, %arg4: memref<8x1xf32, #tpu.memory_space<vmem>>, %arg5: memref<1x8x256xf32, #tpu.memory_space<vmem>>) attributes {dimension_semantics = [#tpu.dimension_semantics<parallel>, #tpu.dimension_semantics<parallel>], iteration_bounds = array<i64: 2, 1>, scalar_prefetch = 0 : i64, scratch_operands = 0 : i64, tpu.core_type = #tpu.core_type<tc>, window_params = [{transform_indices = @transform_0, window_bounds = array<i64: 1, 4, 256>}, {pipeline_mode = #tpu.pipeline_mode<synchronous>, transform_indices = @transform_1, window_bounds = array<i64: 8, 4>}, {pipeline_mode = #tpu.pipeline_mode<synchronous>, transform_indices = @transform_2, window_bounds = array<i64: 8, 1>}, {transform_indices = @transform_3, window_bounds = array<i64: 1, 8, 256>}]} {
    %c0 = arith.constant 0 : index
    %c0_0 = arith.constant 0 : index
    %0 = vector.load %arg3[%c0, %c0_0] : memref<8x4xf32, #tpu.memory_space<vmem>>, vector<8x4xf32>
    %c0_1 = arith.constant 0 : index
    %c0_2 = arith.constant 0 : index
    %1 = vector.load %arg4[%c0_1, %c0_2] : memref<8x1xf32, #tpu.memory_space<vmem>>, vector<8x1xf32>
    %c0_3 = arith.constant 0 : index
    %c0_4 = arith.constant 0 : index
    %c0_5 = arith.constant 0 : index
    %2 = vector.load %arg2[%c0_3, %c0_4, %c0_5] : memref<1x4x256xf32, #tpu.memory_space<vmem>>, vector<1x4x256xf32>
    %3 = vector.shape_cast %2 : vector<1x4x256xf32> to vector<4x256xf32>
    %cst = arith.constant dense<0.000000e+00> : vector<8x256xf32>
    %4 = tpu.matmul %0, %3, %cst {dimension_numbers = #tpu.dot_dimension_numbers<[1], [0], [0], [1], [0, 0, 1, 1], [], []>} : vector<8x4xf32>, vector<4x256xf32>, vector<8x256xf32> -> vector<8x256xf32>
    %5 = vector.broadcast %1 : vector<8x1xf32> to vector<8x256xf32>
    %6 = arith.addf %4, %5 : vector<8x256xf32>
    %cst_6 = arith.constant 0.000000e+00 : f32
    %7 = vector.broadcast %cst_6 : f32 to vector<8x256xf32>
    %8 = arith.maximumf %6, %7 : vector<8x256xf32>
    %c0_7 = arith.constant 0 : index
    %c0_8 = arith.constant 0 : index
    %c0_9 = arith.constant 0 : index
    %9 = vector.load %arg5[%c0_7, %c0_8, %c0_9] : memref<1x8x256xf32, #tpu.memory_space<vmem>>, vector<1x8x256xf32>
    %10 = vector.shape_cast %9 : vector<1x8x256xf32> to vector<8x256xf32>
    %11 = vector.shape_cast %8 : vector<8x256xf32> to vector<1x8x256xf32>
    tpu.vector_store %arg5[%c0_7, %c0_8, %c0_9], %11 {strides = array<i32>} : memref<1x8x256xf32, #tpu.memory_space<vmem>>, vector<1x8x256xf32>,
    return
  }
  func.func @transform_0(%arg0: i32, %arg1: i32) -> (i32, i32, i32) {
    %c0_i32 = arith.constant 0 : i32
    %c0_i32_0 = arith.constant 0 : i32
    return %arg0, %c0_i32, %arg1 : i32, i32, i32
  }
  func.func @transform_1(%arg0: i32, %arg1: i32) -> (i32, i32) {
    %c0_i32 = arith.constant 0 : i32
    %c0_i32_0 = arith.constant 0 : i32
    %c0_i32_1 = arith.constant 0 : i32
    return %c0_i32, %c0_i32_0 : i32, i32
  }
  func.func @transform_2(%arg0: i32, %arg1: i32) -> (i32, i32) {
    %c0_i32 = arith.constant 0 : i32
    %c0_i32_0 = arith.constant 0 : i32
    %c0_i32_1 = arith.constant 0 : i32
    return %c0_i32, %c0_i32_0 : i32, i32
  }
  func.func @transform_3(%arg0: i32, %arg1: i32) -> (i32, i32, i32) {
    %c0_i32 = arith.constant 0 : i32
    %c0_i32_0 = arith.constant 0 : i32
    return %arg0, %c0_i32, %arg1 : i32, i32, i32
  }
}

</mosaic_0001>

<llo_original>
// kernel: tpu_custom_call.1
$region0: #{tpu_custom_call.1}
  #allocation0 [shape = 'u32[]', space=smem, size = 0x4, offset = 0x4, fixed_abs, tag = 'smem constant byte address 0x4 - core index']
  #allocation1 [shape = 'u32[72,128]{1,0:T(1,128)}', space=vmem, size = 0x9000, scoped, tag = 'internal scratch']
  %s0 = inlined_call_operand.vmem [shape: f32[2,4,256], index: 0, kind: input, shape index: {}]
  %s1 = inlined_call_operand.vmem [shape: f32[8,4], index: 1, kind: input, shape index: {}]
  %s2 = inlined_call_operand.vmem [shape: f32[8,1], index: 2, kind: input, shape index: {}]
  %s3 = inlined_call_operand.hbm [shape: f32[2,8,256], index: 3, kind: output, shape index: {}]
  %s4 = sld [smem:[#allocation0]]
  $region45: #{tpu_custom_call.1} parent=0
    _
  %s6 = ssub.s32 1, %s4
  %s7 = scalar_select 0, %s6, %s4
  $region1: #{tpu_custom_call.1} parent=0
    #allocation2 [shape = 'u8[16384]{0}', space=vmem, size = 0x4000, scoped, tag = 'output window, operand 0']
    #allocation3 [shape = 's32[2]{0}', space=sflag, size = 0x8, scoped, tag = 'scoped memory for tpu_custom_call.1']
    %8 = vsyncpa [#allocation3], 0
    %s9 = scalar_lea.sflag [#allocation3], 1
    %10 = vsyncpa %s9, 0
    loop: start=0, step=1, limit=4
    $region2: #{tpu_custom_call.1} parent=1 // loop_pre_header
      _
    $region3: #{tpu_custom_call.1} parent=1 // loop_header
      %s12 = sphi 0, %s16
      %p13 = scmp.ge.s32.totalorder %s12, 4
      %s19 = sphi 0, %s31
      %s20 = sphi 0, %s27
      %s21 = sphi 0, %s19
      %s22 = sphi 0, %s20
      %s23 = sphi 0, %s21
      %s24 = sphi 0, %s22
      %s36 = sphi 0, %s38
      %s39 = sphi 0, %s36
      %s40 = sphi 0, %s39
      %s56 = sphi 0, %s40
      %s60 = sphi 0, %s60
      %s62 = sphi 0, %s60
      %s63 = sphi 0, %s62
      %s77 = sphi 0, %s63
      %s81 = sphi 0, %s81
      %s83 = sphi 0, %s81
      %s84 = sphi 0, %s83
      %s98 = sphi 0, %s84
      %s106 = sphi 0, %s108
      %s109 = sphi 0, %s106
      %s110 = sphi 0, %s109
      %s126 = sphi 0, %s110
    $region4: #{tpu_custom_call.1} parent=1 // loop_header_branch
      %15 = sbr.rel (%p13) target = $region8
    $region5: #{tpu_custom_call.1} parent=1 // loop_body
      %s17 = ssub.s32 %s12, 1
      %s18 = ssub.s32 %s12, 2
      %s25 = sadd.s32 1, %s20
      %p26 = scmp.ge.s32.totalorder %s25, 1
      %s27 = scalar_select %p26, 0, %s25
      %s28 = sadd.s32 1, %s19
      %s29 = scalar_select %p26, %s28, %s19
      %p30 = scmp.ge.s32.totalorder %s29, 2
      %s31 = scalar_select %p30, 0, %s29
      %s32 = ssub.s32 %s19, %s31
      %s33 = ssub.s32 %s20, %s27
      %s34 = sor.u32 %s32, %s33
      %p35 = scmp.eq.s32.totalorder %s34, 0
      %s37 = sadd.s32 %s36, 1
      %s38 = scalar_select %p35, %s36, %s37
      %p41 = pneg %p35
      %p42 = scmp.eq.s32.totalorder %s12, 1
      %p43 = por %p41, %p42
      %p44 = scmp.ne.s32.totalorder %s36, %s39
      %p45 = scmp.eq.s32.totalorder %s12, 0
      %p46 = por %p44, %p45
      %p47 = scmp.ne.s32.totalorder %s36, %s39
      %p48 = scmp.eq.s32.totalorder %s17, 1
      %p49 = por %p47, %p48
      %p50 = scmp.ne.s32.totalorder %s39, %s40
      %p51 = scmp.eq.s32.totalorder %s17, 0
      %p52 = por %p50, %p51
      %p53 = scmp.ne.s32.totalorder %s39, %s40
      %p54 = scmp.eq.s32.totalorder %s18, 1
      %p55 = por %p53, %p54
      %p57 = scmp.ne.s32.totalorder %s40, %s56
      %p58 = scmp.eq.s32.totalorder %s18, 0
      %p59 = por %p57, %p58
      %s61 = sadd.s32 %s60, 1
      %p64 = scmp.eq.s32.totalorder %s12, 1
      %p65 = scmp.ne.s32.totalorder %s60, %s62
      %p66 = scmp.eq.s32.totalorder %s12, 0
      %p67 = por %p65, %p66
      %p68 = scmp.ne.s32.totalorder %s60, %s62
      %p69 = scmp.eq.s32.totalorder %s17, 1
      %p70 = por %p68, %p69
      %p71 = scmp.ne.s32.totalorder %s62, %s63
      %p72 = scmp.eq.s32.totalorder %s17, 0
      %p73 = por %p71, %p72
      %p74 = scmp.ne.s32.totalorder %s62, %s63
      %p75 = scmp.eq.s32.totalorder %s18, 1
      %p76 = por %p74, %p75
      %p78 = scmp.ne.s32.totalorder %s63, %s77
      %p79 = scmp.eq.s32.totalorder %s18, 0
      %p80 = por %p78, %p79
      %s82 = sadd.s32 %s81, 1
      %p85 = scmp.eq.s32.totalorder %s12, 1
      %p86 = scmp.ne.s32.totalorder %s81, %s83
      %p87 = scmp.eq.s32.totalorder %s12, 0
      %p88 = por %p86, %p87
      %p89 = scmp.ne.s32.totalorder %s81, %s83
      %p90 = scmp.eq.s32.totalorder %s17, 1
      %p91 = por %p89, %p90
      %p92 = scmp.ne.s32.totalorder %s83, %s84
      %p93 = scmp.eq.s32.totalorder %s17, 0
      %p94 = por %p92, %p93
      %p95 = scmp.ne.s32.totalorder %s83, %s84
      %p96 = scmp.eq.s32.totalorder %s18, 1
      %p97 = por %p95, %p96
      %p99 = scmp.ne.s32.totalorder %s84, %s98
      %p100 = scmp.eq.s32.totalorder %s18, 0
      %p101 = por %p99, %p100
      %s102 = ssub.s32 %s19, %s31
      %s103 = ssub.s32 %s20, %s27
      %s104 = sor.u32 %s102, %s103
      %p105 = scmp.eq.s32.totalorder %s104, 0
      %s107 = sadd.s32 %s106, 1
      %s108 = scalar_select %p105, %s106, %s107
      %p111 = pneg %p105
      %p112 = scmp.eq.s32.totalorder %s12, 1
      %p113 = por %p111, %p112
      %p114 = scmp.ne.s32.totalorder %s106, %s109
      %p115 = scmp.eq.s32.totalorder %s12, 0
      %p116 = por %p114, %p115
      %p117 = scmp.ne.s32.totalorder %s106, %s109
      %p118 = scmp.eq.s32.totalorder %s17, 1
      %p119 = por %p117, %p118
      %p120 = scmp.ne.s32.totalorder %s109, %s110
      %p121 = scmp.eq.s32.totalorder %s17, 0
      %p122 = por %p120, %p121
      %p123 = scmp.ne.s32.totalorder %s109, %s110
      %p124 = scmp.eq.s32.totalorder %s18, 1
      %p125 = por %p123, %p124
      %p127 = scmp.ne.s32.totalorder %s110, %s126
      %p128 = scmp.eq.s32.totalorder %s18, 0
      %p129 = por %p127, %p128
      %p130 = scmp.le.s32.totalorder 1, %s12
      %p131 = scmp.lt.s32.totalorder %s12, 3
      %p132 = pnand %p130, %p131
      %p133 = pneg %p132
      // Predicated region
      $region9: #{tpu_custom_call.1} parent=5 // pred_check
        _
      $region10: #{tpu_custom_call.1} parent=5 // pred_check_branch
        %135 = sbr.rel (%p132) target = $region12
      $region11: #{tpu_custom_call.1} parent=5 // pred_region
        %s136 = ssub.s32 %s12, 1
        // Predicated region
        $region13: #{tpu_custom_call.1} parent=11 // pred_check
          %p137 = pneg %p73
        $region14: #{tpu_custom_call.1} parent=11 // pred_check_branch
          %139 = sbr.rel (%p137) target = $region16
        $region15: #{tpu_custom_call.1} parent=11 // pred_region
          _
        $region16: #{tpu_custom_call.1} parent=11 // pred_fallthru
          _
        // Predicated region
        $region17: #{tpu_custom_call.1} parent=11 // pred_check
          %p140 = pneg %p94
        $region18: #{tpu_custom_call.1} parent=11 // pred_check_branch
          %142 = sbr.rel (%p140) target = $region20
        $region19: #{tpu_custom_call.1} parent=11 // pred_region
          _
        $region20: #{tpu_custom_call.1} parent=11 // pred_fallthru
          _
      $region12: #{tpu_custom_call.1} parent=5 // pred_fallthru
        _
      %p143 = scmp.lt.s32.totalorder %s12, 2
      // Predicated region
      $region21: #{tpu_custom_call.1} parent=5 // pred_check
        %p144 = pneg %p143
      $region22: #{tpu_custom_call.1} parent=5 // pred_check_branch
        %146 = sbr.rel (%p144) target = $region24
      $region23: #{tpu_custom_call.1} parent=5 // pred_region
        // Predicated region
        $region25: #{tpu_custom_call.1} parent=23 // pred_check
          %p147 = pneg %p46
        $region26: #{tpu_custom_call.1} parent=23 // pred_check_branch
          %149 = sbr.rel (%p147) target = $region28
        $region27: #{tpu_custom_call.1} parent=23 // pred_region
          %s150 = smul.u32 2, %s20
          %p151 = scmp.lt.s32.totalorder %s19, 1
          %s152 = scalar_select %p151, %s19, 1
          %p153 = scmp.lt.s32.totalorder %s150, 1
          %s154 = scalar_select %p153, %s150, 1
          %s155 = smul.addr %s152, 2
          %s156 = sadd.s32 %s154, %s155
          %s157 = smul.addr %s156, 4
          %s158 = scalar_lea.vmem %s0, %s157
          %s159 = smul.u32 2, %s20
        $region28: #{tpu_custom_call.1} parent=23 // pred_fallthru
          _
      $region24: #{tpu_custom_call.1} parent=5 // pred_fallthru
        _
      %p160 = scmp.le.s32.totalorder 1, %s12
      %p161 = scmp.lt.s32.totalorder %s12, 3
      %p162 = pnand %p160, %p161
      %p163 = pneg %p162
      // Predicated region
      $region29: #{tpu_custom_call.1} parent=5 // pred_check
        _
      $region30: #{tpu_custom_call.1} parent=5 // pred_check_branch
        %165 = sbr.rel (%p162) target = $region32
      $region31: #{tpu_custom_call.1} parent=5 // pred_region
        %s166 = ssub.s32 %s12, 1
        %s167 = smul.u32 2, %s22
        %p168 = scmp.lt.s32.totalorder %s21, 1
        %s169 = scalar_select %p168, %s21, 1
        %p170 = scmp.lt.s32.totalorder %s167, 1
        %s171 = scalar_select %p170, %s167, 1
        %s172 = smul.addr %s169, 2
        %s173 = sadd.s32 %s171, %s172
        %s174 = smul.addr %s173, 4
        %s175 = scalar_lea.vmem %s0, %s174
        %p176 = pneg %p52
        %p177 = pneg %p49
        %p178 = pneg %p73
        %p179 = pneg %p70
        %p180 = pneg %p94
        %p181 = pneg %p91
        %p182 = pneg %p122
        %p183 = pneg %p119
        %s184 = sand.u32 %s109, 1
        %s185 = scalar_lea.sflag [#allocation3], %s184
        %s186 = sand.u32 %s109, 1
        %s187 = smul.addr %s186, 16
        %s188 = scalar_lea.vmem [#allocation2], %s187
        %s189 = smul.u32 2, %s22
        %p190 = scmp.lt.s32.totalorder %s21, 1
        %s191 = scalar_select %p190, %s21, 1
        %p192 = scmp.lt.s32.totalorder %s189, 1
        %s193 = scalar_select %p192, %s189, 1
        %s194 = smul.addr %s191, 2
        %s195 = sadd.s32 %s193, %s194
        %s196 = smul.addr %s195, 4
        %s197 = scalar_lea.vmem %s0, %s196
        %s198 = smul.u32 2, %s22
        %s199 = smul.u32 2, %s22
        %v200 = vld [vmem:[%s1] sm:$0xff]
        %v201 = vld [vmem:[%s2] sm:$0xff]
        %v202 = vld [vmem:[%s197] sm:$0xff]
        %204 = vset.pattern.permute.xlu0 0
        %205 = vperm.xlu0 %204, %v201
        %v206 = vpop.permute.xlu0 %205
        %209 = vst [vmem:[#allocation1] ss:$2 sm:$0xff] %v202
        %v210 = vld.sshfl [vmem:[#allocation1] sm:$0xff pattern:$0x75316420]
        %v211 = vld.sshfl [vmem:[#allocation1 + $0x8] sm:$0xff pattern:$0x75316420]
        %vm212 = vcmask 31744
        %v214 = vsel %vm212, %v200, 0
        %vm216 = vcmask 1043456
        %v217 = vsel %vm216, %v210, 0
        %v219 = vsel %vm216, %v211, 0
        %221 = vmatpush.msra.mxu0 0.0
        %222 = vmatpush.msra.mxu0 0.0
        %223 = vmatpush.msra.mxu0 0.0
        %224 = vmatpush.msra.mxu0 0.0
        %225 = vmatpush.msra.mxu0 0.0
        %226 = vmatpush.msra.mxu0 0.0
        %227 = vmatpush.msra.mxu0 0.0
        %228 = vmatpush.msra.mxu0 0.0
        %229 = vmatpush.msra.mxu0 0.0
        %230 = vmatpush.msra.mxu0 0.0
        %231 = vmatpush.msra.mxu0 0.0
        %232 = vmatpush.msra.mxu0 0.0
        %233 = vmatpush.msra.mxu0 0.0
        %234 = vmatpush.msra.mxu0 0.0
        %235 = vmatpush.msra.mxu0 0.0
        %236 = vmatpush.msra.mxu0 %v217
        %237 = vmatmul.f32.gmra.mxu0 %v214
        %v238 = vpop.f32.mrf.mxu0
        %v239 = vadd.f32 %v206, %v238
        %240 = vdwg.mxu0
        %241 = vmatpush.msra.mxu0 0.0
        %242 = vmatpush.msra.mxu0 0.0
        %243 = vmatpush.msra.mxu0 0.0
        %244 = vmatpush.msra.mxu0 0.0
        %245 = vmatpush.msra.mxu0 0.0
        %246 = vmatpush.msra.mxu0 0.0
        %247 = vmatpush.msra.mxu0 0.0
        %248 = vmatpush.msra.mxu0 0.0
        %249 = vmatpush.msra.mxu0 0.0
        %250 = vmatpush.msra.mxu0 0.0
        %251 = vmatpush.msra.mxu0 0.0
        %252 = vmatpush.msra.mxu0 0.0
        %253 = vmatpush.msra.mxu0 0.0
        %254 = vmatpush.msra.mxu0 0.0
        %255 = vmatpush.msra.mxu0 0.0
        %256 = vmatpush.msra.mxu0 %v219
        %257 = vmatmul.f32.gmra.mxu0 %v214
        %v258 = vpop.f32.mrf.mxu0
        %v259 = vadd.f32 %v206, %v258
        %260 = vdwg.mxu0
        %v261 = vmax.f32 %v239, 0.0
        %v262 = vmax.f32 %v259, 0.0
        %263 = vst [vmem:[%s188] sm:$0xff] %v261
        %264 = vst [vmem:[%s188 + $0x8] sm:$0xff] %v262
        %s265 = sand.u32 %s109, 1
        %s266 = scalar_lea.sflag [#allocation3], %s265
        %s267 = sand.u32 %s109, 1
        %s268 = smul.addr %s267, 16
        %s269 = scalar_lea.vmem [#allocation2], %s268
        // Predicated region
        $region33: #{tpu_custom_call.1} parent=31 // pred_check
          %p270 = pneg %p119
        $region34: #{tpu_custom_call.1} parent=31 // pred_check_branch
          %272 = sbr.rel (%p270) target = $region36
        $region35: #{tpu_custom_call.1} parent=31 // pred_region
          %s273 = smul.u32 2, %s22
          %275 = vsyncadd %s266, 0
          %s276 = smul.addr %s21, 2
          %s277 = sadd.s32 %s273, %s276
          %s278 = smul.addr %s277, 8
          %s279 = scalar_lea.hbm %s3, %s278
          %s281 = sshll.u32 %s269, 4
          %s282 = int_to_ptr.vmem [resolvable:$true] %s281
          %s283 = sshll.u32 %s279, 4
          %s284 = int_to_ptr.hbm [resolvable:$true] %s283
          %286 = dma.vmem_to_hbm [thread:$0]  %s282, 256, %s284, %s266
        $region36: #{tpu_custom_call.1} parent=31 // pred_fallthru
          _
      $region32: #{tpu_custom_call.1} parent=5 // pred_fallthru
        _
      %p287 = scmp.le.s32.totalorder 2, %s12
      // Predicated region
      $region37: #{tpu_custom_call.1} parent=5 // pred_check
        %p288 = pneg %p287
      $region38: #{tpu_custom_call.1} parent=5 // pred_check_branch
        %290 = sbr.rel (%p288) target = $region40
      $region39: #{tpu_custom_call.1} parent=5 // pred_region
        %s291 = ssub.s32 %s12, 2
        // Predicated region
        $region41: #{tpu_custom_call.1} parent=39 // pred_check
          %p292 = pneg %p125
        $region42: #{tpu_custom_call.1} parent=39 // pred_check_branch
          %294 = sbr.rel (%p292) target = $region44
        $region43: #{tpu_custom_call.1} parent=39 // pred_region
          %s295 = sand.u32 %s110, 1
          %s296 = scalar_lea.sflag [#allocation3], %s295
          %s297 = sand.u32 %s110, 1
          %s298 = smul.addr %s297, 16
          %s299 = scalar_lea.vmem [#allocation2], %s298
          %301 = dma.done %s296, 256
        $region44: #{tpu_custom_call.1} parent=39 // pred_fallthru
          _
      $region40: #{tpu_custom_call.1} parent=5 // pred_fallthru
        _
    $region6: #{tpu_custom_call.1} parent=1 // loop_footer
      %s16 = sadd.s32 1, %s12
    $region7: #{tpu_custom_call.1} parent=1 // loop_footer_branch
      %11 = sbr.rel target = $region3
    $region8: #{tpu_custom_call.1} parent=1 // loop_exit
      _
    %302 = vsyncpa [#allocation3], 1
    %s303 = scalar_lea.sflag [#allocation3], 1
    %304 = vsyncpa %s303, 1

</llo_original>
